<compile_context>
chip_gen: v7x
topology: tpu7x:2x2x1
jax: 0.10.0
libtpu: 0.0.40
codegen_flags: <defaults>
</compile_context>

<pallas_src>
import jax
import jax.numpy as jnp
from jax.experimental import pallas as pl
from jax.experimental.pallas import tpu as pltpu


IN_FEATURES = 256
OUT_FEATURES = 6

# 1024 rows * 256 feats * 4 B = 1 MiB per x tile -> ~2 MiB double-buffered.
# Fits comfortably inside the default scoped VMEM on v5e / v6e / v7x while
# being large enough (>=512 rows) to hit ~85% of the HBM roofline.
MAX_TILE_B = 1024


def _linear_kernel(x_ref, w_ref, b_ref, o_ref):
    # x_ref: (TILE_B, 256)  w_ref: (256, 6)  b_ref: (1, 6)  o_ref: (TILE_B, 6)
    # Single (TILE_B,256) x (256,6) MXU matmul with f32 accumulation.
    acc = jnp.dot(x_ref[...], w_ref[...], preferred_element_type=jnp.float32)
    o_ref[...] = (acc + b_ref[...]).astype(o_ref.dtype)


def _choose_tile_b(batch):
    """Pick a batch tile: whole batch (rounded up to a sublane multiple of 8)
    for small B, otherwise a fixed 1024-row tile."""
    if batch <= MAX_TILE_B:
        return max(8, pl.cdiv(batch, 8) * 8)
    return MAX_TILE_B


def regression_network_forward(x, w_t, b):
    """x: (B, 256), w_t: (256, 6) (pre-transposed), b: (6,)  ->  (B, 2, 3).

    Equivalent of PyTorch: nn.Linear(256, 6)(x).view(-1, 2, 3)

    NOTE: for tiny batches (B <~ a few hundred rows) a plain `x @ w_t + b`
    in XLA is faster than any pallas_call launch; this kernel pays off at
    large B where the tiled, double-buffered pipeline reaches the HBM
    roofline.
    """
    B = x.shape[0]
    tile_b = _choose_tile_b(B)
    grid = (pl.cdiv(B, tile_b),)
    b2d = b.reshape(1, OUT_FEATURES)

    y = pl.pallas_call(
        _linear_kernel,
        out_shape=jax.ShapeDtypeStruct((B, OUT_FEATURES), x.dtype),
        grid_spec=pltpu.PrefetchScalarGridSpec(
            num_scalar_prefetch=0,
            grid=grid,
            in_specs=[
                # batch-tiled input: DMA for tile i+1 overlaps compute on i
                pl.BlockSpec((tile_b, IN_FEATURES), lambda i: (i, 0)),
                # weight + bias: constant block index -> resident in VMEM
                pl.BlockSpec((IN_FEATURES, OUT_FEATURES), lambda i: (0, 0)),
                pl.BlockSpec((1, OUT_FEATURES), lambda i: (0, 0)),
            ],
            # Output last dim is 6 (<128) -> masked stores; accepted since the
            # large batch tile amortizes the tiny output DMA and padding W to
            # 128 lanes would add ~+50% HBM write traffic.
            out_specs=pl.BlockSpec((tile_b, OUT_FEATURES), lambda i: (i, 0)),
        ),
        compiler_params=pltpu.CompilerParams(
            # Row-wise independent op: shard batch tiles across both
            # TensorCores on v7x (harmless on single-TC v5e/v6e).
            dimension_semantics=("parallel",),
        ),
    )(x, w_t, b2d)

    # Partial-tile note: if tile_b does not divide B, the last tile reads OOB
    # padding rows of x and the corresponding OOB output rows are masked on
    # store. This is safe because each output row depends only on its own
    # input row — do NOT add cross-row reductions without revisiting this.
    return y.reshape(-1, 2, 3)


def init_params(key):
    """Deterministic synthetic init mimicking nn.Linear(256, 6) shapes."""
    kw, kb = jax.random.split(key)
    bound = 1.0 / (IN_FEATURES ** 0.5)  # PyTorch default uniform bound
    # Stored pre-transposed: (in_features, out_features)
    w_t = jax.random.uniform(
        kw, (IN_FEATURES, OUT_FEATURES), dtype=jnp.float32,
        minval=-bound, maxval=bound)
    b = jax.random.uniform(
        kb, (OUT_FEATURES,), dtype=jnp.float32, minval=-bound, maxval=bound)
    return w_t, b


if __name__ == "__main__":
    key = jax.random.PRNGKey(0)
    k_x, k_p = jax.random.split(key)

    B = 16  # small batch (multiple of 8 -> single clean tile)
    x = jax.random.normal(k_x, (B, IN_FEATURES), dtype=jnp.float32)
    w_t, b = init_params(k_p)

    out = regression_network_forward(x, w_t, b)
    out = jax.block_until_ready(out)

    # correctness check against plain JAX reference
    ref = (x @ w_t + b).reshape(-1, 2, 3)
    assert out.shape == (B, 2, 3), out.shape
    assert jnp.allclose(out, ref, atol=1e-5, rtol=1e-5)

    print("KERNEL_OK")
</pallas_src>

<mosaic_0001>
module attributes {stable_mosaic.version = 11 : i64} {
  func.func @_linear_kernel(%arg0: i32, %arg1: memref<16x256xf32, #tpu.memory_space<vmem>>, %arg2: memref<256x6xf32, #tpu.memory_space<vmem>>, %arg3: memref<1x6xf32, #tpu.memory_space<vmem>>, %arg4: memref<16x6xf32, #tpu.memory_space<vmem>>) attributes {dimension_semantics = [#tpu.dimension_semantics<parallel>], iteration_bounds = array<i64: 1>, scalar_prefetch = 0 : i64, scratch_operands = 0 : i64, tpu.core_type = #tpu.core_type<tc>, window_params = [{transform_indices = @transform_0, window_bounds = array<i64: 16, 256>}, {pipeline_mode = #tpu.pipeline_mode<synchronous>, transform_indices = @transform_1, window_bounds = array<i64: 256, 6>}, {pipeline_mode = #tpu.pipeline_mode<synchronous>, transform_indices = @transform_2, window_bounds = array<i64: 1, 6>}, {transform_indices = @transform_3, window_bounds = array<i64: 16, 6>}]} {
    %c0 = arith.constant 0 : index
    %c0_0 = arith.constant 0 : index
    %0 = vector.load %arg1[%c0, %c0_0] : memref<16x256xf32, #tpu.memory_space<vmem>>, vector<16x256xf32>
    %c0_1 = arith.constant 0 : index
    %c0_2 = arith.constant 0 : index
    %1 = vector.load %arg2[%c0_1, %c0_2] : memref<256x6xf32, #tpu.memory_space<vmem>>, vector<256x6xf32>
    %cst = arith.constant dense<0.000000e+00> : vector<16x6xf32>
    %2 = tpu.matmul %0, %1, %cst {dimension_numbers = #tpu.dot_dimension_numbers<[1], [0], [0], [1], [0, 0, 1, 1], [], []>} : vector<16x256xf32>, vector<256x6xf32>, vector<16x6xf32> -> vector<16x6xf32>
    %c0_3 = arith.constant 0 : index
    %c0_4 = arith.constant 0 : index
    %3 = vector.load %arg3[%c0_3, %c0_4] : memref<1x6xf32, #tpu.memory_space<vmem>>, vector<1x6xf32>
    %4 = vector.broadcast %3 : vector<1x6xf32> to vector<16x6xf32>
    %5 = arith.addf %2, %4 : vector<16x6xf32>
    %c0_5 = arith.constant 0 : index
    %c0_6 = arith.constant 0 : index
    %6 = vector.load %arg4[%c0_5, %c0_6] : memref<16x6xf32, #tpu.memory_space<vmem>>, vector<16x6xf32>
    tpu.vector_store %arg4[%c0_5, %c0_6], %5 {strides = array<i32>} : memref<16x6xf32, #tpu.memory_space<vmem>>, vector<16x6xf32>,
    return
  }
  func.func @transform_0(%arg0: i32) -> (i32, i32) {
    %c0_i32 = arith.constant 0 : i32
    %c0_i32_0 = arith.constant 0 : i32
    return %arg0, %c0_i32 : i32, i32
  }
  func.func @transform_1(%arg0: i32) -> (i32, i32) {
    %c0_i32 = arith.constant 0 : i32
    %c0_i32_0 = arith.constant 0 : i32
    %c0_i32_1 = arith.constant 0 : i32
    return %c0_i32, %c0_i32_0 : i32, i32
  }
  func.func @transform_2(%arg0: i32) -> (i32, i32) {
    %c0_i32 = arith.constant 0 : i32
    %c0_i32_0 = arith.constant 0 : i32
    %c0_i32_1 = arith.constant 0 : i32
    return %c0_i32, %c0_i32_0 : i32, i32
  }
  func.func @transform_3(%arg0: i32) -> (i32, i32) {
    %c0_i32 = arith.constant 0 : i32
    %c0_i32_0 = arith.constant 0 : i32
    return %arg0, %c0_i32 : i32, i32
  }
}

</mosaic_0001>

<llo_original>
// kernel: tpu_custom_call.1
$region0: #{tpu_custom_call.1}
  #allocation0 [shape = 'u32[]', space=smem, size = 0x4, offset = 0x4, fixed_abs, tag = 'smem constant byte address 0x4 - core index']
  #allocation1 [shape = 'u32[144,128]{1,0:T(1,128)}', space=vmem, size = 0x12000, scoped, tag = 'internal scratch']
  %s0 = inlined_call_operand.vmem [shape: f32[16,256], index: 0, kind: input, shape index: {}]
  %s1 = inlined_call_operand.vmem [shape: f32[256,6], index: 1, kind: input, shape index: {}]
  %s2 = inlined_call_operand.vmem [shape: f32[1,6], index: 2, kind: input, shape index: {}]
  %s3 = inlined_call_operand.vmem [shape: f32[16,6], index: 3, kind: output, shape index: {}]
  %s4 = sld [smem:[#allocation0]]
  $region22: #{tpu_custom_call.1} parent=0
    _
  %s6 = ssub.s32 1, %s4
  %s7 = scalar_select 0, %s6, %s4
  // Predicated region
  $region2: #{tpu_custom_call.1} parent=0 // pred_check
    _
  $region3: #{tpu_custom_call.1} parent=0 // pred_check_branch
    %9 = sbr.rel (0) target = $region5
  $region4: #{tpu_custom_call.1} parent=0 // pred_region
    _
  $region5: #{tpu_custom_call.1} parent=0 // pred_fallthru
    _
  // Predicated region
  $region6: #{tpu_custom_call.1} parent=0 // pred_check
    _
  $region7: #{tpu_custom_call.1} parent=0 // pred_check_branch
    %11 = sbr.rel (0) target = $region9
  $region8: #{tpu_custom_call.1} parent=0 // pred_region
    _
  $region9: #{tpu_custom_call.1} parent=0 // pred_fallthru
    _
  // Predicated region
  $region10: #{tpu_custom_call.1} parent=0 // pred_check
    _
  $region11: #{tpu_custom_call.1} parent=0 // pred_check_branch
    %13 = sbr.rel (0) target = $region13
  $region12: #{tpu_custom_call.1} parent=0 // pred_region
    _
  $region13: #{tpu_custom_call.1} parent=0 // pred_fallthru
    _
  %v14 = vld [vmem:[%s0] sm:$0xff]
  %v15 = vld [vmem:[%s0 + $0x8] sm:$0xff]
  %v16 = vld [vmem:[%s0 + $0x10] sm:$0xff]
  %v17 = vld [vmem:[%s0 + $0x18] sm:$0xff]
  %v18 = vld [vmem:[%s1] sm:$0xff]
  %v19 = vld [vmem:[%s1 + $0x8] sm:$0xff]
  %v20 = vld [vmem:[%s1 + $0x10] sm:$0xff]
  %v21 = vld [vmem:[%s1 + $0x18] sm:$0xff]
  %v22 = vld [vmem:[%s1 + $0x20] sm:$0xff]
  %v23 = vld [vmem:[%s1 + $0x28] sm:$0xff]
  %v24 = vld [vmem:[%s1 + $0x30] sm:$0xff]
  %v25 = vld [vmem:[%s1 + $0x38] sm:$0xff]
  %v26 = vld [vmem:[%s1 + $0x40] sm:$0xff]
  %v27 = vld [vmem:[%s1 + $0x48] sm:$0xff]
  %v28 = vld [vmem:[%s1 + $0x50] sm:$0xff]
  %v29 = vld [vmem:[%s1 + $0x58] sm:$0xff]
  %v30 = vld [vmem:[%s1 + $0x60] sm:$0xff]
  %v31 = vld [vmem:[%s1 + $0x68] sm:$0xff]
  %v32 = vld [vmem:[%s1 + $0x70] sm:$0xff]
  %v33 = vld [vmem:[%s1 + $0x78] sm:$0xff]
  %v34 = vld [vmem:[%s1 + $0x80] sm:$0xff]
  %v35 = vld [vmem:[%s1 + $0x88] sm:$0xff]
  %v36 = vld [vmem:[%s1 + $0x90] sm:$0xff]
  %v37 = vld [vmem:[%s1 + $0x98] sm:$0xff]
  %v38 = vld [vmem:[%s1 + $0xa0] sm:$0xff]
  %v39 = vld [vmem:[%s1 + $0xa8] sm:$0xff]
  %v40 = vld [vmem:[%s1 + $0xb0] sm:$0xff]
  %v41 = vld [vmem:[%s1 + $0xb8] sm:$0xff]
  %v42 = vld [vmem:[%s1 + $0xc0] sm:$0xff]
  %v43 = vld [vmem:[%s1 + $0xc8] sm:$0xff]
  %v44 = vld [vmem:[%s1 + $0xd0] sm:$0xff]
  %v45 = vld [vmem:[%s1 + $0xd8] sm:$0xff]
  %v46 = vld [vmem:[%s1 + $0xe0] sm:$0xff]
  %v47 = vld [vmem:[%s1 + $0xe8] sm:$0xff]
  %v48 = vld [vmem:[%s1 + $0xf0] sm:$0xff]
  %v49 = vld [vmem:[%s1 + $0xf8] sm:$0xff]
  %v50 = vld [vmem:[%s2] sm:$0x1]
  %v52 = vlaneseq
  %v53 = vshrl.u32 %v52, 7
  %v54 = vsub.s32 0, %v53
  %v55 = vrot.slane %v50, %v54
  %57 = vmatprep.subr.mxu0 0.0
  %58 = vmatpush1.msra.mxu0 %v18
  %59 = vmatprep.subr.mxu0 0.0
  %60 = vmatpush1.msra.mxu0 %v19
  %61 = vmatprep.subr.mxu0 0.0
  %62 = vmatpush1.msra.mxu0 %v20
  %63 = vmatprep.subr.mxu0 0.0
  %64 = vmatpush1.msra.mxu0 %v21
  %65 = vmatprep.subr.mxu0 0.0
  %66 = vmatpush1.msra.mxu0 %v22
  %67 = vmatprep.subr.mxu0 0.0
  %68 = vmatpush1.msra.mxu0 %v23
  %69 = vmatprep.subr.mxu0 0.0
  %70 = vmatpush1.msra.mxu0 %v24
  %71 = vmatprep.subr.mxu0 0.0
  %72 = vmatpush1.msra.mxu0 %v25
  %73 = vmatprep.subr.mxu0 0.0
  %74 = vmatpush1.msra.mxu0 %v26
  %75 = vmatprep.subr.mxu0 0.0
  %76 = vmatpush1.msra.mxu0 %v27
  %77 = vmatprep.subr.mxu0 0.0
  %78 = vmatpush1.msra.mxu0 %v28
  %79 = vmatprep.subr.mxu0 0.0
  %80 = vmatpush1.msra.mxu0 %v29
  %81 = vmatprep.subr.mxu0 0.0
  %82 = vmatpush1.msra.mxu0 %v30
  %83 = vmatprep.subr.mxu0 0.0
  %84 = vmatpush1.msra.mxu0 %v31
  %85 = vmatprep.subr.mxu0 0.0
  %86 = vmatpush1.msra.mxu0 %v32
  %87 = vmatprep.subr.mxu0 0.0
  %88 = vmatpush1.msra.mxu0 %v33
  %89 = vmatprep.subr.mxu0 0.0
  %90 = vmatpush1.msra.mxu0 %v34
  %91 = vmatprep.subr.mxu0 0.0
  %92 = vmatpush1.msra.mxu0 %v35
  %93 = vmatprep.subr.mxu0 0.0
  %94 = vmatpush1.msra.mxu0 %v36
  %95 = vmatprep.subr.mxu0 0.0
  %96 = vmatpush1.msra.mxu0 %v37
  %97 = vmatprep.subr.mxu0 0.0
  %98 = vmatpush1.msra.mxu0 %v38
  %99 = vmatprep.subr.mxu0 0.0
  %100 = vmatpush1.msra.mxu0 %v39
  %101 = vmatprep.subr.mxu0 0.0
  %102 = vmatpush1.msra.mxu0 %v40
  %103 = vmatprep.subr.mxu0 0.0
  %104 = vmatpush1.msra.mxu0 %v41
  %105 = vmatprep.subr.mxu0 0.0
  %106 = vmatpush1.msra.mxu0 %v42
  %107 = vmatprep.subr.mxu0 0.0
  %108 = vmatpush1.msra.mxu0 %v43
  %109 = vmatprep.subr.mxu0 0.0
  %110 = vmatpush1.msra.mxu0 %v44
  %111 = vmatprep.subr.mxu0 0.0
  %112 = vmatpush1.msra.mxu0 %v45
  %113 = vmatprep.subr.mxu0 0.0
  %114 = vmatpush1.msra.mxu0 %v46
  %115 = vmatprep.subr.mxu0 0.0
  %116 = vmatpush1.msra.mxu0 %v47
  %117 = vmatprep.subr.mxu0 0.0
  %118 = vmatpush1.msra.mxu0 %v48
  %119 = vmatprep.subr.mxu0 0.0
  %120 = vmatpush1.msra.mxu0 %v49
  %121 = vmatprep.mubr.f32.mxu0 %v15
  %122 = vmatmul.mubr.f32.gmra.mrb[0].mxu0 %v14
  %v123 = vpop.f32.mrb[0].mxu0
  %v124 = vadd.f32 %v55, %v123
  %v125 = vpop.f32.mrb[0].mxu0
  %126 = vmatprep.mubr.f32.mxu0 %v17
  %127 = vmatmul.mubr.f32.gmra.mrb[0].mxu0 %v16
  %v128 = vpop.f32.mrb[0].mxu0
  %v129 = vadd.f32 %v55, %v128
  %v130 = vpop.f32.mrb[0].mxu0
  %131 = vdwg.mxu0
  %vm132 = vcmask 48128
  %133 = vst.msk [vmem:[%s3] sm:$0xff] %vm132, %v124
  %134 = vst.msk [vmem:[%s3 + $0x8] sm:$0xff] %vm132, %v129
  // Predicated region
  $region14: #{tpu_custom_call.1} parent=0 // pred_check
    _
  $region15: #{tpu_custom_call.1} parent=0 // pred_check_branch
    %136 = sbr.rel (0) target = $region17
  $region16: #{tpu_custom_call.1} parent=0 // pred_region
    _
  $region17: #{tpu_custom_call.1} parent=0 // pred_fallthru
    _
  // Predicated region
  $region18: #{tpu_custom_call.1} parent=0 // pred_check
    _
  $region19: #{tpu_custom_call.1} parent=0 // pred_check_branch
    %138 = sbr.rel (0) target = $region21
  $region20: #{tpu_custom_call.1} parent=0 // pred_region
    _
  $region21: #{tpu_custom_call.1} parent=0 // pred_fallthru
    _

</llo_original>
